<compile_context>
chip_gen: v5e
topology: v5e:2x2
jax: 0.10.0
libtpu: 0.0.40
codegen_flags: <defaults>
</compile_context>

<pallas_src>
import jax
import jax.numpy as jnp
from jax.experimental import pallas as pl
from jax.experimental.pallas import tpu as pltpu

_LANE_CANDIDATES = (1024, 512, 256, 128)  # lane-dense widths (multiples of 128)
_MAX_TILE_BYTES = 8 << 20                 # 8 MiB tile cap (v5e/v6e sweet spot)
_SMALL_INPUT_ELEMS = 64 * 1024            # below this, fused XLA sigmoid wins


def _round_up(x: int, m: int) -> int:
    return (x + m - 1) // m * m


def _vmem_capacity_bytes() -> int:
    """Per-core VMEM capacity; conservative (v7x) default if the query fails."""
    try:
        return int(pltpu.get_tpu_info().vmem_capacity_bytes)
    except Exception:
        return 64 << 20


def _sigmoid_kernel(x_ref, o_ref):
    # output1 = relu(x) in the torch module is never returned -> omitted.
    x = x_ref[...]
    # bf16 inputs stay bf16 on the VPU/EUP (v6e/v7x have bf16 paths; on v5e
    # Mosaic widens as needed).  Everything else computes in f32.
    xc = x if x.dtype == jnp.bfloat16 else x.astype(jnp.float32)
    # Exact sigmoid via tanh: one EUP transcendental/elem, mul/add ride free
    # VALU slots, saturates exactly to 0 / 1 at the tails.
    y = 0.5 * jnp.tanh(0.5 * xc) + 0.5
    o_ref[...] = y.astype(o_ref.dtype)


def tt_forward(x: jax.Array, *, donate_input: bool = False) -> jax.Array:
    """Pallas implementation of TT.forward: returns sigmoid(x)."""
    orig_shape = x.shape
    total = x.size
    itemsize = x.dtype.itemsize

    # Tiny inputs (e.g. the module's original (1,1,2,2)): launch overhead
    # dominates, use XLA's fused sigmoid.
    if total < _SMALL_INPUT_ELEMS:
        return jax.nn.sigmoid(x)

    # Pick the widest lane count (multiple of 128) that divides the element
    # count exactly -> no wrapper-side pad or slice, full-lane `vst` stores.
    lanes = next((l for l in _LANE_CANDIDATES if total % l == 0), None)
    if lanes is None:
        # Odd element counts would force pad + slice (two extra HBM passes on a
        # bandwidth-bound op); the fused XLA sigmoid is the better tool there.
        return jax.nn.sigmoid(x)

    rows = total // lanes  # >= 64 given the small-input threshold above

    # Generation-aware tile sizing: keep 2x(in+out) double-buffering <= VMEM/4.
    vmem = _vmem_capacity_bytes()
    tile_bytes = min(_MAX_TILE_BYTES, vmem // 16)
    tile_rows = max(8, tile_bytes // (lanes * itemsize) // 8 * 8)
    # Guarantee >= 2 grid steps so the parallel axis shards across both v7x TCs.
    tile_rows = min(tile_rows, _round_up(pl.cdiv(rows, 2), 8))
    grid = (pl.cdiv(rows, tile_rows),)  # ragged last block is masked by Pallas

    x2d = x.reshape(rows, lanes)
    out2d = pl.pallas_call(
        _sigmoid_kernel,
        out_shape=jax.ShapeDtypeStruct((rows, lanes), x.dtype),
        grid=grid,
        in_specs=[pl.BlockSpec((tile_rows, lanes), lambda i: (i, 0))],
        out_specs=pl.BlockSpec((tile_rows, lanes), lambda i: (i, 0)),
        compiler_params=pltpu.CompilerParams(
            dimension_semantics=("parallel",),
            vmem_limit_bytes=min(64 << 20, vmem // 2),
        ),
        cost_estimate=pl.CostEstimate(
            flops=3 * total,
            transcendentals=total,
            bytes_accessed=2 * total * itemsize,
        ),
        # Only alias when the caller truly donates x; otherwise XLA would copy.
        input_output_aliases=({0: 0} if donate_input else {}),
    )(x2d)

    return out2d.reshape(orig_shape)


if __name__ == "__main__":
    # Pallas path: batch=2, channels=4, 128x128 spatial -> (128, 1024) slab,
    # 2 pipelined grid steps (so both v7x TensorCores get work).
    x = jax.random.normal(jax.random.PRNGKey(0), (2, 4, 128, 128), dtype=jnp.float32)
    out = jax.block_until_ready(tt_forward(x))
    ref = jax.nn.sigmoid(x)
    assert out.shape == x.shape
    assert jnp.allclose(out, ref, atol=1e-5, rtol=1e-5), "mismatch vs reference sigmoid"

    # Module-sized small input: takes the fused-XLA fallback path.
    x_small = jax.random.normal(jax.random.PRNGKey(1), (2, 4, 16, 16), dtype=jnp.float32)
    out_small = jax.block_until_ready(tt_forward(x_small))
    assert jnp.allclose(out_small, jax.nn.sigmoid(x_small), atol=1e-6)

    # Original script's (1,1,2,2) input also takes the tiny-input fallback path.
    x_tiny = jax.random.normal(jax.random.PRNGKey(2), (1, 1, 2, 2), dtype=jnp.float32)
    out_tiny = jax.block_until_ready(tt_forward(x_tiny))
    assert jnp.allclose(out_tiny, jax.nn.sigmoid(x_tiny), atol=1e-6)

    print("KERNEL_OK")
</pallas_src>

<mosaic_0001>
module attributes {stable_mosaic.version = 11 : i64} {
  func.func @_sigmoid_kernel(%arg0: i32, %arg1: memref<64x1024xf32, #tpu.memory_space<vmem>>, %arg2: memref<64x1024xf32, #tpu.memory_space<vmem>>) attributes {dimension_semantics = [#tpu.dimension_semantics<parallel>], iteration_bounds = array<i64: 2>, scalar_prefetch = 0 : i64, scratch_operands = 0 : i64, tpu.core_type = #tpu.core_type<tc>, window_params = [{transform_indices = @transform_0, window_bounds = array<i64: 64, 1024>}, {transform_indices = @transform_1, window_bounds = array<i64: 64, 1024>}]} {
    %c0 = arith.constant 0 : index
    %c0_0 = arith.constant 0 : index
    %0 = vector.load %arg1[%c0, %c0_0] : memref<64x1024xf32, #tpu.memory_space<vmem>>, vector<64x1024xf32>
    %cst = arith.constant 5.000000e-01 : f32
    %1 = vector.broadcast %cst : f32 to vector<64x1024xf32>
    %2 = arith.mulf %1, %0 : vector<64x1024xf32>
    %3 = math.tanh %2 : vector<64x1024xf32>
    %cst_1 = arith.constant 5.000000e-01 : f32
    %4 = vector.broadcast %cst_1 : f32 to vector<64x1024xf32>
    %5 = arith.mulf %4, %3 : vector<64x1024xf32>
    %cst_2 = arith.constant 5.000000e-01 : f32
    %6 = vector.broadcast %cst_2 : f32 to vector<64x1024xf32>
    %7 = arith.addf %5, %6 : vector<64x1024xf32>
    %c0_3 = arith.constant 0 : index
    %c0_4 = arith.constant 0 : index
    %8 = vector.load %arg2[%c0_3, %c0_4] : memref<64x1024xf32, #tpu.memory_space<vmem>>, vector<64x1024xf32>
    tpu.vector_store %arg2[%c0_3, %c0_4], %7 {strides = array<i32>} : memref<64x1024xf32, #tpu.memory_space<vmem>>, vector<64x1024xf32>,
    return
  }
  func.func @transform_0(%arg0: i32) -> (i32, i32) {
    %c0_i32 = arith.constant 0 : i32
    %c0_i32_0 = arith.constant 0 : i32
    return %arg0, %c0_i32 : i32, i32
  }
  func.func @transform_1(%arg0: i32) -> (i32, i32) {
    %c0_i32 = arith.constant 0 : i32
    %c0_i32_0 = arith.constant 0 : i32
    return %arg0, %c0_i32 : i32, i32
  }
}

</mosaic_0001>

<llo_original>
// kernel: tpu_custom_call.1
$region0: #{tpu_custom_call.1}
  #allocation0 [shape = 'u32[]', space=smem, size = 0x4, offset = 0x4, fixed_abs, tag = 'smem constant byte address 0x4 - core index']
  #allocation1 [shape = 'u32[72,128]{1,0:T(1,128)}', space=vmem, size = 0x9000, scoped, tag = 'internal scratch']
  %s0 = inlined_call_operand.hbm [shape: f32[128,1024], index: 0, kind: input, shape index: {}]
  %s1 = inlined_call_operand.hbm [shape: f32[128,1024], index: 1, kind: output, shape index: {}]
  %s2 = sld [smem:[#allocation0]]
  $region41: #{tpu_custom_call.1} parent=0
    _
  %s4 = ssub.s32 1, %s2
  %s5 = scalar_select 0, %s4, %s2
  $region1: #{tpu_custom_call.1} parent=0
    #allocation2 [shape = 'u8[524288]{0}', space=vmem, size = 0x80000, scoped, tag = 'input window, operand 0']
    #allocation3 [shape = 's32[2]{0}', space=sflag, size = 0x8, scoped, tag = 'scoped memory for tpu_custom_call.1']
    #allocation4 [shape = 's32[2]{0}', space=sflag, size = 0x8, scoped, tag = 'scoped memory for tpu_custom_call.1']
    #allocation5 [shape = 'u8[524288]{0}', space=vmem, size = 0x80000, scoped, tag = 'output window, operand 0']
    %6 = vsyncpa [#allocation3], 0
    %s7 = scalar_lea.sflag [#allocation3], 1
    %8 = vsyncpa %s7, 0
    %9 = vsyncpa [#allocation4], 0
    %s10 = scalar_lea.sflag [#allocation4], 1
    %11 = vsyncpa %s10, 0
    loop: start=0, step=1, limit=4
    $region2: #{tpu_custom_call.1} parent=1 // loop_pre_header
      _
    $region3: #{tpu_custom_call.1} parent=1 // loop_header
      %s13 = sphi 0, %s17
      %p14 = scmp.ge.s32.totalorder %s13, 4
      %s23 = sphi 0, %s25
      %s26 = sphi 0, %s23
      %s27 = sphi 0, %s26
      %s43 = sphi 0, %s27
      %s49 = sphi 0, %s51
      %s52 = sphi 0, %s49
      %s53 = sphi 0, %s52
      %s69 = sphi 0, %s53
    $region4: #{tpu_custom_call.1} parent=1 // loop_header_branch
      %16 = sbr.rel (%p14) target = $region8
    $region5: #{tpu_custom_call.1} parent=1 // loop_body
      %s18 = ssub.s32 %s13, 1
      %s19 = ssub.s32 %s13, 2
      %s20 = sadd.s32 %s13, 1
      %s21 = ssub.s32 %s13, %s20
      %p22 = scmp.eq.s32.totalorder %s21, 0
      %s24 = sadd.s32 %s23, 1
      %s25 = scalar_select %p22, %s23, %s24
      %p28 = pneg %p22
      %p29 = scmp.eq.s32.totalorder %s13, 1
      %p30 = por %p28, %p29
      %p31 = scmp.ne.s32.totalorder %s23, %s26
      %p32 = scmp.eq.s32.totalorder %s13, 0
      %p33 = por %p31, %p32
      %p34 = scmp.ne.s32.totalorder %s23, %s26
      %p35 = scmp.eq.s32.totalorder %s18, 1
      %p36 = por %p34, %p35
      %p37 = scmp.ne.s32.totalorder %s26, %s27
      %p38 = scmp.eq.s32.totalorder %s18, 0
      %p39 = por %p37, %p38
      %p40 = scmp.ne.s32.totalorder %s26, %s27
      %p41 = scmp.eq.s32.totalorder %s19, 1
      %p42 = por %p40, %p41
      %p44 = scmp.ne.s32.totalorder %s27, %s43
      %p45 = scmp.eq.s32.totalorder %s19, 0
      %p46 = por %p44, %p45
      %s47 = ssub.s32 %s13, %s20
      %p48 = scmp.eq.s32.totalorder %s47, 0
      %s50 = sadd.s32 %s49, 1
      %s51 = scalar_select %p48, %s49, %s50
      %p54 = pneg %p48
      %p55 = scmp.eq.s32.totalorder %s13, 1
      %p56 = por %p54, %p55
      %p57 = scmp.ne.s32.totalorder %s49, %s52
      %p58 = scmp.eq.s32.totalorder %s13, 0
      %p59 = por %p57, %p58
      %p60 = scmp.ne.s32.totalorder %s49, %s52
      %p61 = scmp.eq.s32.totalorder %s18, 1
      %p62 = por %p60, %p61
      %p63 = scmp.ne.s32.totalorder %s52, %s53
      %p64 = scmp.eq.s32.totalorder %s18, 0
      %p65 = por %p63, %p64
      %p66 = scmp.ne.s32.totalorder %s52, %s53
      %p67 = scmp.eq.s32.totalorder %s19, 1
      %p68 = por %p66, %p67
      %p70 = scmp.ne.s32.totalorder %s53, %s69
      %p71 = scmp.eq.s32.totalorder %s19, 0
      %p72 = por %p70, %p71
      %p73 = scmp.le.s32.totalorder 1, %s13
      %p74 = scmp.lt.s32.totalorder %s13, 3
      %p75 = pnand %p73, %p74
      %p76 = pneg %p75
      // Predicated region
      $region9: #{tpu_custom_call.1} parent=5 // pred_check
        _
      $region10: #{tpu_custom_call.1} parent=5 // pred_check_branch
        %78 = sbr.rel (%p75) target = $region12
      $region11: #{tpu_custom_call.1} parent=5 // pred_region
        %s79 = ssub.s32 %s13, 1
      $region12: #{tpu_custom_call.1} parent=5 // pred_fallthru
        _
      %p80 = scmp.lt.s32.totalorder %s13, 2
      // Predicated region
      $region13: #{tpu_custom_call.1} parent=5 // pred_check
        %p81 = pneg %p80
      $region14: #{tpu_custom_call.1} parent=5 // pred_check_branch
        %83 = sbr.rel (%p81) target = $region16
      $region15: #{tpu_custom_call.1} parent=5 // pred_region
        // Predicated region
        $region17: #{tpu_custom_call.1} parent=15 // pred_check
          %p84 = pneg %p33
        $region18: #{tpu_custom_call.1} parent=15 // pred_check_branch
          %86 = sbr.rel (%p84) target = $region20
        $region19: #{tpu_custom_call.1} parent=15 // pred_region
          %s87 = sand.u32 %s23, 1
          %s88 = scalar_lea.sflag [#allocation3], %s87
          %s89 = sand.u32 %s23, 1
          %s90 = smul.addr %s89, 512
          %s91 = scalar_lea.vmem [#allocation2], %s90
          %s92 = smul.u32 8, %s13
          %94 = vsyncadd %s88, 0
          %s95 = smul.addr %s92, 8
          %s96 = smul.addr %s95, 8
          %s97 = scalar_lea.hbm %s0, %s96
          %s98 = sshll.u32 %s97, 4
          %s99 = int_to_ptr.hbm [resolvable:$true] %s98
          %s100 = sshll.u32 %s91, 4
          %s101 = int_to_ptr.vmem [resolvable:$true] %s100
          %106 = dma.hbm_to_vmem [thread:$0]  %s99, 8192, %s101, %s88, 1024, 1024, 64
        $region20: #{tpu_custom_call.1} parent=15 // pred_fallthru
          _
      $region16: #{tpu_custom_call.1} parent=5 // pred_fallthru
        _
      %p107 = scmp.le.s32.totalorder 1, %s13
      %p108 = scmp.lt.s32.totalorder %s13, 3
      %p109 = pnand %p107, %p108
      %p110 = pneg %p109
      // Predicated region
      $region21: #{tpu_custom_call.1} parent=5 // pred_check
        _
      $region22: #{tpu_custom_call.1} parent=5 // pred_check_branch
        %112 = sbr.rel (%p109) target = $region24
      $region23: #{tpu_custom_call.1} parent=5 // pred_region
        %s113 = ssub.s32 %s13, 1
        %s114 = sand.u32 %s26, 1
        %s115 = scalar_lea.sflag [#allocation3], %s114
        %s116 = sand.u32 %s26, 1
        %s117 = smul.addr %s116, 512
        %s118 = scalar_lea.vmem [#allocation2], %s117
        // Predicated region
        $region25: #{tpu_custom_call.1} parent=23 // pred_check
          %p119 = pneg %p39
        $region26: #{tpu_custom_call.1} parent=23 // pred_check_branch
          %121 = sbr.rel (%p119) target = $region28
        $region27: #{tpu_custom_call.1} parent=23 // pred_region
          %123 = dma.done %s115, 8192
        $region28: #{tpu_custom_call.1} parent=23 // pred_fallthru
          _
        %s124 = sand.u32 %s26, 1
        %s125 = scalar_lea.sflag [#allocation3], %s124
        %s126 = sand.u32 %s26, 1
        %s127 = smul.addr %s126, 512
        %s128 = scalar_lea.vmem [#allocation2], %s127
        %p129 = pneg %p39
        %p130 = pneg %p36
        %p131 = pneg %p65
        %p132 = pneg %p62
        %s133 = sand.u32 %s52, 1
        %s134 = scalar_lea.sflag [#allocation4], %s133
        %s135 = sand.u32 %s52, 1
        %s136 = smul.addr %s135, 512
        %s137 = scalar_lea.vmem [#allocation5], %s136
        %s138 = smul.u32 8, %s18
        %s139 = smul.u32 8, %s18
        %v140 = vld [vmem:[%s118] sm:$0xff]
        %v141 = vld [vmem:[%s118 + $0x8] sm:$0xff]
        %v142 = vld [vmem:[%s118 + $0x10] sm:$0xff]
        %v143 = vld [vmem:[%s118 + $0x18] sm:$0xff]
        %v144 = vld [vmem:[%s118 + $0x20] sm:$0xff]
        %v145 = vld [vmem:[%s118 + $0x28] sm:$0xff]
        %v146 = vld [vmem:[%s118 + $0x30] sm:$0xff]
        %v147 = vld [vmem:[%s118 + $0x38] sm:$0xff]
        %v148 = vld [vmem:[%s118 + $0x40] sm:$0xff]
        %v149 = vld [vmem:[%s118 + $0x48] sm:$0xff]
        %v150 = vld [vmem:[%s118 + $0x50] sm:$0xff]
        %v151 = vld [vmem:[%s118 + $0x58] sm:$0xff]
        %v152 = vld [vmem:[%s118 + $0x60] sm:$0xff]
        %v153 = vld [vmem:[%s118 + $0x68] sm:$0xff]
        %v154 = vld [vmem:[%s118 + $0x70] sm:$0xff]
        %v155 = vld [vmem:[%s118 + $0x78] sm:$0xff]
        %v156 = vld [vmem:[%s118 + $0x80] sm:$0xff]
        %v157 = vld [vmem:[%s118 + $0x88] sm:$0xff]
        %v158 = vld [vmem:[%s118 + $0x90] sm:$0xff]
        %v159 = vld [vmem:[%s118 + $0x98] sm:$0xff]
        %v160 = vld [vmem:[%s118 + $0xa0] sm:$0xff]
        %v161 = vld [vmem:[%s118 + $0xa8] sm:$0xff]
        %v162 = vld [vmem:[%s118 + $0xb0] sm:$0xff]
        %v163 = vld [vmem:[%s118 + $0xb8] sm:$0xff]
        %v164 = vld [vmem:[%s118 + $0xc0] sm:$0xff]
        %v165 = vld [vmem:[%s118 + $0xc8] sm:$0xff]
        %v166 = vld [vmem:[%s118 + $0xd0] sm:$0xff]
        %v167 = vld [vmem:[%s118 + $0xd8] sm:$0xff]
        %v168 = vld [vmem:[%s118 + $0xe0] sm:$0xff]
        %v169 = vld [vmem:[%s118 + $0xe8] sm:$0xff]
        %v170 = vld [vmem:[%s118 + $0xf0] sm:$0xff]
        %v171 = vld [vmem:[%s118 + $0xf8] sm:$0xff]
        %v172 = vld [vmem:[%s118 + $0x100] sm:$0xff]
        %v173 = vld [vmem:[%s118 + $0x108] sm:$0xff]
        %v174 = vld [vmem:[%s118 + $0x110] sm:$0xff]
        %v175 = vld [vmem:[%s118 + $0x118] sm:$0xff]
        %v176 = vld [vmem:[%s118 + $0x120] sm:$0xff]
        %v177 = vld [vmem:[%s118 + $0x128] sm:$0xff]
        %v178 = vld [vmem:[%s118 + $0x130] sm:$0xff]
        %v179 = vld [vmem:[%s118 + $0x138] sm:$0xff]
        %v180 = vld [vmem:[%s118 + $0x140] sm:$0xff]
        %v181 = vld [vmem:[%s118 + $0x148] sm:$0xff]
        %v182 = vld [vmem:[%s118 + $0x150] sm:$0xff]
        %v183 = vld [vmem:[%s118 + $0x158] sm:$0xff]
        %v184 = vld [vmem:[%s118 + $0x160] sm:$0xff]
        %v185 = vld [vmem:[%s118 + $0x168] sm:$0xff]
        %v186 = vld [vmem:[%s118 + $0x170] sm:$0xff]
        %v187 = vld [vmem:[%s118 + $0x178] sm:$0xff]
        %v188 = vld [vmem:[%s118 + $0x180] sm:$0xff]
        %v189 = vld [vmem:[%s118 + $0x188] sm:$0xff]
        %v190 = vld [vmem:[%s118 + $0x190] sm:$0xff]
        %v191 = vld [vmem:[%s118 + $0x198] sm:$0xff]
        %v192 = vld [vmem:[%s118 + $0x1a0] sm:$0xff]
        %v193 = vld [vmem:[%s118 + $0x1a8] sm:$0xff]
        %v194 = vld [vmem:[%s118 + $0x1b0] sm:$0xff]
        %v195 = vld [vmem:[%s118 + $0x1b8] sm:$0xff]
        %v196 = vld [vmem:[%s118 + $0x1c0] sm:$0xff]
        %v197 = vld [vmem:[%s118 + $0x1c8] sm:$0xff]
        %v198 = vld [vmem:[%s118 + $0x1d0] sm:$0xff]
        %v199 = vld [vmem:[%s118 + $0x1d8] sm:$0xff]
        %v200 = vld [vmem:[%s118 + $0x1e0] sm:$0xff]
        %v201 = vld [vmem:[%s118 + $0x1e8] sm:$0xff]
        %v202 = vld [vmem:[%s118 + $0x1f0] sm:$0xff]
        %v203 = vld [vmem:[%s118 + $0x1f8] sm:$0xff]
        %v204 = vmul.f32 %v140, 0.5
        %v205 = vmul.f32 %v141, 0.5
        %v206 = vmul.f32 %v142, 0.5
        %v207 = vmul.f32 %v143, 0.5
        %v208 = vmul.f32 %v144, 0.5
        %v209 = vmul.f32 %v145, 0.5
        %v210 = vmul.f32 %v146, 0.5
        %v211 = vmul.f32 %v147, 0.5
        %v212 = vmul.f32 %v148, 0.5
        %v213 = vmul.f32 %v149, 0.5
        %v214 = vmul.f32 %v150, 0.5
        %v215 = vmul.f32 %v151, 0.5
        %v216 = vmul.f32 %v152, 0.5
        %v217 = vmul.f32 %v153, 0.5
        %v218 = vmul.f32 %v154, 0.5
        %v219 = vmul.f32 %v155, 0.5
        %v220 = vmul.f32 %v156, 0.5
        %v221 = vmul.f32 %v157, 0.5
        %v222 = vmul.f32 %v158, 0.5
        %v223 = vmul.f32 %v159, 0.5
        %v224 = vmul.f32 %v160, 0.5
        %v225 = vmul.f32 %v161, 0.5
        %v226 = vmul.f32 %v162, 0.5
        %v227 = vmul.f32 %v163, 0.5
        %v228 = vmul.f32 %v164, 0.5
        %v229 = vmul.f32 %v165, 0.5
        %v230 = vmul.f32 %v166, 0.5
        %v231 = vmul.f32 %v167, 0.5
        %v232 = vmul.f32 %v168, 0.5
        %v233 = vmul.f32 %v169, 0.5
        %v234 = vmul.f32 %v170, 0.5
        %v235 = vmul.f32 %v171, 0.5
        %v236 = vmul.f32 %v172, 0.5
        %v237 = vmul.f32 %v173, 0.5
        %v238 = vmul.f32 %v174, 0.5
        %v239 = vmul.f32 %v175, 0.5
        %v240 = vmul.f32 %v176, 0.5
        %v241 = vmul.f32 %v177, 0.5
        %v242 = vmul.f32 %v178, 0.5
        %v243 = vmul.f32 %v179, 0.5
        %v244 = vmul.f32 %v180, 0.5
        %v245 = vmul.f32 %v181, 0.5
        %v246 = vmul.f32 %v182, 0.5
        %v247 = vmul.f32 %v183, 0.5
        %v248 = vmul.f32 %v184, 0.5
        %v249 = vmul.f32 %v185, 0.5
        %v250 = vmul.f32 %v186, 0.5
        %v251 = vmul.f32 %v187, 0.5
        %v252 = vmul.f32 %v188, 0.5
        %v253 = vmul.f32 %v189, 0.5
        %v254 = vmul.f32 %v190, 0.5
        %v255 = vmul.f32 %v191, 0.5
        %v256 = vmul.f32 %v192, 0.5
        %v257 = vmul.f32 %v193, 0.5
        %v258 = vmul.f32 %v194, 0.5
        %v259 = vmul.f32 %v195, 0.5
        %v260 = vmul.f32 %v196, 0.5
        %v261 = vmul.f32 %v197, 0.5
        %v262 = vmul.f32 %v198, 0.5
        %v263 = vmul.f32 %v199, 0.5
        %v264 = vmul.f32 %v200, 0.5
        %v265 = vmul.f32 %v201, 0.5
        %v266 = vmul.f32 %v202, 0.5
        %v267 = vmul.f32 %v203, 0.5
        %v268 = vtanh.pop %v204
        %v269 = vtanh.pop %v205
        %v270 = vtanh.pop %v206
        %v271 = vtanh.pop %v207
        %v272 = vtanh.pop %v208
        %v273 = vtanh.pop %v209
        %v274 = vtanh.pop %v210
        %v275 = vtanh.pop %v211
        %v276 = vtanh.pop %v212
        %v277 = vtanh.pop %v213
        %v278 = vtanh.pop %v214
        %v279 = vtanh.pop %v215
        %v280 = vtanh.pop %v216
        %v281 = vtanh.pop %v217
        %v282 = vtanh.pop %v218
        %v283 = vtanh.pop %v219
        %v284 = vtanh.pop %v220
        %v285 = vtanh.pop %v221
        %v286 = vtanh.pop %v222
        %v287 = vtanh.pop %v223
        %v288 = vtanh.pop %v224
        %v289 = vtanh.pop %v225
        %v290 = vtanh.pop %v226
        %v291 = vtanh.pop %v227
        %v292 = vtanh.pop %v228
        %v293 = vtanh.pop %v229
        %v294 = vtanh.pop %v230
        %v295 = vtanh.pop %v231
        %v296 = vtanh.pop %v232
        %v297 = vtanh.pop %v233
        %v298 = vtanh.pop %v234
        %v299 = vtanh.pop %v235
        %v300 = vtanh.pop %v236
        %v301 = vtanh.pop %v237
        %v302 = vtanh.pop %v238
        %v303 = vtanh.pop %v239
        %v304 = vtanh.pop %v240
        %v305 = vtanh.pop %v241
        %v306 = vtanh.pop %v242
        %v307 = vtanh.pop %v243
        %v308 = vtanh.pop %v244
        %v309 = vtanh.pop %v245
        %v310 = vtanh.pop %v246
        %v311 = vtanh.pop %v247
        %v312 = vtanh.pop %v248
        %v313 = vtanh.pop %v249
        %v314 = vtanh.pop %v250
        %v315 = vtanh.pop %v251
        %v316 = vtanh.pop %v252
        %v317 = vtanh.pop %v253
        %v318 = vtanh.pop %v254
        %v319 = vtanh.pop %v255
        %v320 = vtanh.pop %v256
        %v321 = vtanh.pop %v257
        %v322 = vtanh.pop %v258
        %v323 = vtanh.pop %v259
        %v324 = vtanh.pop %v260
        %v325 = vtanh.pop %v261
        %v326 = vtanh.pop %v262
        %v327 = vtanh.pop %v263
        %v328 = vtanh.pop %v264
        %v329 = vtanh.pop %v265
        %v330 = vtanh.pop %v266
        %v331 = vtanh.pop %v267
        %v332 = vmul.f32 %v268, 0.5
        %v333 = vmul.f32 %v269, 0.5
        %v334 = vmul.f32 %v270, 0.5
        %v335 = vmul.f32 %v271, 0.5
        %v336 = vmul.f32 %v272, 0.5
        %v337 = vmul.f32 %v273, 0.5
        %v338 = vmul.f32 %v274, 0.5
        %v339 = vmul.f32 %v275, 0.5
        %v340 = vmul.f32 %v276, 0.5
        %v341 = vmul.f32 %v277, 0.5
        %v342 = vmul.f32 %v278, 0.5
        %v343 = vmul.f32 %v279, 0.5
        %v344 = vmul.f32 %v280, 0.5
        %v345 = vmul.f32 %v281, 0.5
        %v346 = vmul.f32 %v282, 0.5
        %v347 = vmul.f32 %v283, 0.5
        %v348 = vmul.f32 %v284, 0.5
        %v349 = vmul.f32 %v285, 0.5
        %v350 = vmul.f32 %v286, 0.5
        %v351 = vmul.f32 %v287, 0.5
        %v352 = vmul.f32 %v288, 0.5
        %v353 = vmul.f32 %v289, 0.5
        %v354 = vmul.f32 %v290, 0.5
        %v355 = vmul.f32 %v291, 0.5
        %v356 = vmul.f32 %v292, 0.5
        %v357 = vmul.f32 %v293, 0.5
        %v358 = vmul.f32 %v294, 0.5
        %v359 = vmul.f32 %v295, 0.5
        %v360 = vmul.f32 %v296, 0.5
        %v361 = vmul.f32 %v297, 0.5
        %v362 = vmul.f32 %v298, 0.5
        %v363 = vmul.f32 %v299, 0.5
        %v364 = vmul.f32 %v300, 0.5
        %v365 = vmul.f32 %v301, 0.5
        %v366 = vmul.f32 %v302, 0.5
        %v367 = vmul.f32 %v303, 0.5
        %v368 = vmul.f32 %v304, 0.5
        %v369 = vmul.f32 %v305, 0.5
        %v370 = vmul.f32 %v306, 0.5
        %v371 = vmul.f32 %v307, 0.5
        %v372 = vmul.f32 %v308, 0.5
        %v373 = vmul.f32 %v309, 0.5
        %v374 = vmul.f32 %v310, 0.5
        %v375 = vmul.f32 %v311, 0.5
        %v376 = vmul.f32 %v312, 0.5
        %v377 = vmul.f32 %v313, 0.5
        %v378 = vmul.f32 %v314, 0.5
        %v379 = vmul.f32 %v315, 0.5
        %v380 = vmul.f32 %v316, 0.5
        %v381 = vmul.f32 %v317, 0.5
        %v382 = vmul.f32 %v318, 0.5
        %v383 = vmul.f32 %v319, 0.5
        %v384 = vmul.f32 %v320, 0.5
        %v385 = vmul.f32 %v321, 0.5
        %v386 = vmul.f32 %v322, 0.5
        %v387 = vmul.f32 %v323, 0.5
        %v388 = vmul.f32 %v324, 0.5
        %v389 = vmul.f32 %v325, 0.5
        %v390 = vmul.f32 %v326, 0.5
        %v391 = vmul.f32 %v327, 0.5
        %v392 = vmul.f32 %v328, 0.5
        %v393 = vmul.f32 %v329, 0.5
        %v394 = vmul.f32 %v330, 0.5
        %v395 = vmul.f32 %v331, 0.5
        %v396 = vadd.f32 %v332, 0.5
        %v397 = vadd.f32 %v333, 0.5
        %v398 = vadd.f32 %v334, 0.5
        %v399 = vadd.f32 %v335, 0.5
        %v400 = vadd.f32 %v336, 0.5
        %v401 = vadd.f32 %v337, 0.5
        %v402 = vadd.f32 %v338, 0.5
        %v403 = vadd.f32 %v339, 0.5
        %v404 = vadd.f32 %v340, 0.5
        %v405 = vadd.f32 %v341, 0.5
        %v406 = vadd.f32 %v342, 0.5
        %v407 = vadd.f32 %v343, 0.5
        %v408 = vadd.f32 %v344, 0.5
        %v409 = vadd.f32 %v345, 0.5
        %v410 = vadd.f32 %v346, 0.5
        %v411 = vadd.f32 %v347, 0.5
        %v412 = vadd.f32 %v348, 0.5
        %v413 = vadd.f32 %v349, 0.5
        %v414 = vadd.f32 %v350, 0.5
        %v415 = vadd.f32 %v351, 0.5
        %v416 = vadd.f32 %v352, 0.5
        %v417 = vadd.f32 %v353, 0.5
        %v418 = vadd.f32 %v354, 0.5
        %v419 = vadd.f32 %v355, 0.5
        %v420 = vadd.f32 %v356, 0.5
        %v421 = vadd.f32 %v357, 0.5
        %v422 = vadd.f32 %v358, 0.5
        %v423 = vadd.f32 %v359, 0.5
        %v424 = vadd.f32 %v360, 0.5
        %v425 = vadd.f32 %v361, 0.5
        %v426 = vadd.f32 %v362, 0.5
        %v427 = vadd.f32 %v363, 0.5
        %v428 = vadd.f32 %v364, 0.5
        %v429 = vadd.f32 %v365, 0.5
        %v430 = vadd.f32 %v366, 0.5
        %v431 = vadd.f32 %v367, 0.5
        %v432 = vadd.f32 %v368, 0.5
        %v433 = vadd.f32 %v369, 0.5
        %v434 = vadd.f32 %v370, 0.5
        %v435 = vadd.f32 %v371, 0.5
        %v436 = vadd.f32 %v372, 0.5
        %v437 = vadd.f32 %v373, 0.5
        %v438 = vadd.f32 %v374, 0.5
        %v439 = vadd.f32 %v375, 0.5
        %v440 = vadd.f32 %v376, 0.5
        %v441 = vadd.f32 %v377, 0.5
        %v442 = vadd.f32 %v378, 0.5
        %v443 = vadd.f32 %v379, 0.5
        %v444 = vadd.f32 %v380, 0.5
        %v445 = vadd.f32 %v381, 0.5
        %v446 = vadd.f32 %v382, 0.5
        %v447 = vadd.f32 %v383, 0.5
        %v448 = vadd.f32 %v384, 0.5
        %v449 = vadd.f32 %v385, 0.5
        %v450 = vadd.f32 %v386, 0.5
        %v451 = vadd.f32 %v387, 0.5
        %v452 = vadd.f32 %v388, 0.5
        %v453 = vadd.f32 %v389, 0.5
        %v454 = vadd.f32 %v390, 0.5
        %v455 = vadd.f32 %v391, 0.5
        %v456 = vadd.f32 %v392, 0.5
        %v457 = vadd.f32 %v393, 0.5
        %v458 = vadd.f32 %v394, 0.5
        %v459 = vadd.f32 %v395, 0.5
        %460 = vst [vmem:[%s137] sm:$0xff] %v396
        %461 = vst [vmem:[%s137 + $0x8] sm:$0xff] %v397
        %462 = vst [vmem:[%s137 + $0x10] sm:$0xff] %v398
        %463 = vst [vmem:[%s137 + $0x18] sm:$0xff] %v399
        %464 = vst [vmem:[%s137 + $0x20] sm:$0xff] %v400
        %465 = vst [vmem:[%s137 + $0x28] sm:$0xff] %v401
        %466 = vst [vmem:[%s137 + $0x30] sm:$0xff] %v402
        %467 = vst [vmem:[%s137 + $0x38] sm:$0xff] %v403
        %468 = vst [vmem:[%s137 + $0x40] sm:$0xff] %v404
        %469 = vst [vmem:[%s137 + $0x48] sm:$0xff] %v405
        %470 = vst [vmem:[%s137 + $0x50] sm:$0xff] %v406
        %471 = vst [vmem:[%s137 + $0x58] sm:$0xff] %v407
        %472 = vst [vmem:[%s137 + $0x60] sm:$0xff] %v408
        %473 = vst [vmem:[%s137 + $0x68] sm:$0xff] %v409
        %474 = vst [vmem:[%s137 + $0x70] sm:$0xff] %v410
        %475 = vst [vmem:[%s137 + $0x78] sm:$0xff] %v411
        %476 = vst [vmem:[%s137 + $0x80] sm:$0xff] %v412
        %477 = vst [vmem:[%s137 + $0x88] sm:$0xff] %v413
        %478 = vst [vmem:[%s137 + $0x90] sm:$0xff] %v414
        %479 = vst [vmem:[%s137 + $0x98] sm:$0xff] %v415
        %480 = vst [vmem:[%s137 + $0xa0] sm:$0xff] %v416
        %481 = vst [vmem:[%s137 + $0xa8] sm:$0xff] %v417
        %482 = vst [vmem:[%s137 + $0xb0] sm:$0xff] %v418
        %483 = vst [vmem:[%s137 + $0xb8] sm:$0xff] %v419
        %484 = vst [vmem:[%s137 + $0xc0] sm:$0xff] %v420
        %485 = vst [vmem:[%s137 + $0xc8] sm:$0xff] %v421
        %486 = vst [vmem:[%s137 + $0xd0] sm:$0xff] %v422
        %487 = vst [vmem:[%s137 + $0xd8] sm:$0xff] %v423
        %488 = vst [vmem:[%s137 + $0xe0] sm:$0xff] %v424
        %489 = vst [vmem:[%s137 + $0xe8] sm:$0xff] %v425
        %490 = vst [vmem:[%s137 + $0xf0] sm:$0xff] %v426
        %491 = vst [vmem:[%s137 + $0xf8] sm:$0xff] %v427
        %492 = vst [vmem:[%s137 + $0x100] sm:$0xff] %v428
        %493 = vst [vmem:[%s137 + $0x108] sm:$0xff] %v429
        %494 = vst [vmem:[%s137 + $0x110] sm:$0xff] %v430
        %495 = vst [vmem:[%s137 + $0x118] sm:$0xff] %v431
        %496 = vst [vmem:[%s137 + $0x120] sm:$0xff] %v432
        %497 = vst [vmem:[%s137 + $0x128] sm:$0xff] %v433
        %498 = vst [vmem:[%s137 + $0x130] sm:$0xff] %v434
        %499 = vst [vmem:[%s137 + $0x138] sm:$0xff] %v435
        %500 = vst [vmem:[%s137 + $0x140] sm:$0xff] %v436
        %501 = vst [vmem:[%s137 + $0x148] sm:$0xff] %v437
        %502 = vst [vmem:[%s137 + $0x150] sm:$0xff] %v438
        %503 = vst [vmem:[%s137 + $0x158] sm:$0xff] %v439
        %504 = vst [vmem:[%s137 + $0x160] sm:$0xff] %v440
        %505 = vst [vmem:[%s137 + $0x168] sm:$0xff] %v441
        %506 = vst [vmem:[%s137 + $0x170] sm:$0xff] %v442
        %507 = vst [vmem:[%s137 + $0x178] sm:$0xff] %v443
        %508 = vst [vmem:[%s137 + $0x180] sm:$0xff] %v444
        %509 = vst [vmem:[%s137 + $0x188] sm:$0xff] %v445
        %510 = vst [vmem:[%s137 + $0x190] sm:$0xff] %v446
        %511 = vst [vmem:[%s137 + $0x198] sm:$0xff] %v447
        %512 = vst [vmem:[%s137 + $0x1a0] sm:$0xff] %v448
        %513 = vst [vmem:[%s137 + $0x1a8] sm:$0xff] %v449
        %514 = vst [vmem:[%s137 + $0x1b0] sm:$0xff] %v450
        %515 = vst [vmem:[%s137 + $0x1b8] sm:$0xff] %v451
        %516 = vst [vmem:[%s137 + $0x1c0] sm:$0xff] %v452
        %517 = vst [vmem:[%s137 + $0x1c8] sm:$0xff] %v453
        %518 = vst [vmem:[%s137 + $0x1d0] sm:$0xff] %v454
        %519 = vst [vmem:[%s137 + $0x1d8] sm:$0xff] %v455
        %520 = vst [vmem:[%s137 + $0x1e0] sm:$0xff] %v456
        %521 = vst [vmem:[%s137 + $0x1e8] sm:$0xff] %v457
        %522 = vst [vmem:[%s137 + $0x1f0] sm:$0xff] %v458
        %523 = vst [vmem:[%s137 + $0x1f8] sm:$0xff] %v459
        %s524 = sand.u32 %s52, 1
        %s525 = scalar_lea.sflag [#allocation4], %s524
        %s526 = sand.u32 %s52, 1
        %s527 = smul.addr %s526, 512
        %s528 = scalar_lea.vmem [#allocation5], %s527
        // Predicated region
        $region29: #{tpu_custom_call.1} parent=23 // pred_check
          %p529 = pneg %p62
        $region30: #{tpu_custom_call.1} parent=23 // pred_check_branch
          %531 = sbr.rel (%p529) target = $region32
        $region31: #{tpu_custom_call.1} parent=23 // pred_region
          %s532 = smul.u32 8, %s18
          %534 = vsyncadd %s525, 0
          %s535 = smul.addr %s532, 8
          %s536 = smul.addr %s535, 8
          %s537 = scalar_lea.hbm %s1, %s536
          %s538 = sshll.u32 %s528, 4
          %s539 = int_to_ptr.vmem [resolvable:$true] %s538
          %s540 = sshll.u32 %s537, 4
          %s541 = int_to_ptr.hbm [resolvable:$true] %s540
          %546 = dma.vmem_to_hbm [thread:$0]  %s539, 8192, %s541, %s525, 1024, 1024, 64
        $region32: #{tpu_custom_call.1} parent=23 // pred_fallthru
          _
      $region24: #{tpu_custom_call.1} parent=5 // pred_fallthru
        _
      %p547 = scmp.le.s32.totalorder 2, %s13
      // Predicated region
      $region33: #{tpu_custom_call.1} parent=5 // pred_check
        %p548 = pneg %p547
      $region34: #{tpu_custom_call.1} parent=5 // pred_check_branch
        %550 = sbr.rel (%p548) target = $region36
      $region35: #{tpu_custom_call.1} parent=5 // pred_region
        %s551 = ssub.s32 %s13, 2
        // Predicated region
        $region37: #{tpu_custom_call.1} parent=35 // pred_check
          %p552 = pneg %p68
        $region38: #{tpu_custom_call.1} parent=35 // pred_check_branch
          %554 = sbr.rel (%p552) target = $region40
        $region39: #{tpu_custom_call.1} parent=35 // pred_region
          %s555 = sand.u32 %s53, 1
          %s556 = scalar_lea.sflag [#allocation4], %s555
          %s557 = sand.u32 %s53, 1
          %s558 = smul.addr %s557, 512
          %s559 = scalar_lea.vmem [#allocation5], %s558
          %561 = dma.done %s556, 8192
        $region40: #{tpu_custom_call.1} parent=35 // pred_fallthru
          _
      $region36: #{tpu_custom_call.1} parent=5 // pred_fallthru
        _
    $region6: #{tpu_custom_call.1} parent=1 // loop_footer
      %s17 = sadd.s32 1, %s13
    $region7: #{tpu_custom_call.1} parent=1 // loop_footer_branch
      %12 = sbr.rel target = $region3
    $region8: #{tpu_custom_call.1} parent=1 // loop_exit
      _
    %562 = vsyncpa [#allocation3], 1
    %s563 = scalar_lea.sflag [#allocation3], 1
    %564 = vsyncpa %s563, 1
    %565 = vsyncpa [#allocation4], 1
    %s566 = scalar_lea.sflag [#allocation4], 1
    %567 = vsyncpa %s566, 1

</llo_original>
